<compile_context>
chip_gen: v7x
topology: tpu7x:2x2x1
jax: 0.10.0
libtpu: 0.0.40
codegen_flags: <defaults>
</compile_context>

<pallas_src>
import functools
import math

import jax
import jax.numpy as jnp
from jax.experimental import pallas as pl
from jax.experimental.pallas import tpu as pltpu


_SQRT_2_OVER_PI = 0.7978845608028654


def _gelu_tanh(x):
    """tanh-approximate GELU, computed in f32."""
    return 0.5 * x * (1.0 + jnp.tanh(_SQRT_2_OVER_PI * (x + 0.044715 * x * x * x)))


def _round_up(a, b):
    return (a + b - 1) // b * b


def _pick_hidden_tile(h_pad, cap):
    """Largest multiple-of-128 divisor of h_pad that is <= cap (h_pad % 128 == 0)."""
    cap = min(cap, h_pad)
    best = 128
    t = 128
    while t <= cap:
        if h_pad % t == 0:
            best = t
        t += 128
    return best


def _spec(shape, index_map, *, single_buffer=False):
    """BlockSpec; optionally single-buffered for grid-constant (resident) blocks."""
    if single_buffer and hasattr(pl, "Buffered"):
        try:
            return pl.BlockSpec(shape, index_map, pipeline_mode=pl.Buffered(1))
        except TypeError:
            pass  # older jax without pipeline_mode kwarg -> default buffering
    return pl.BlockSpec(shape, index_map)


def _mlp_kernel(*refs, has_dropout, n_h, matmul_dtype):
    """One (token-tile, hidden-tile) step of fc1 -> GELU -> drop -> fc2 -> drop."""
    if has_dropout:
        (x_ref, w1_ref, b1_ref, w2_ref, b2_ref, m1_ref, m2_ref, o_ref, acc_ref) = refs
    else:
        (x_ref, w1_ref, b1_ref, w2_ref, b2_ref, o_ref, acc_ref) = refs
        m1_ref = m2_ref = None

    h_step = pl.program_id(1)

    @pl.when(h_step == 0)
    def _init():
        acc_ref[...] = jnp.zeros_like(acc_ref)

    # fc1 slab on the MXU (matmul_dtype operands, f32 accumulation).
    x = x_ref[...].astype(matmul_dtype)
    h = jnp.dot(x, w1_ref[...], preferred_element_type=jnp.float32)
    h = h + b1_ref[...]                      # bias in f32
    h = _gelu_tanh(h)                        # f32 elementwise (safe on v5e too)

    if has_dropout:
        h = h * m1_ref[...]                  # pre-scaled mask: {0, 1/keep_prob}

    # fc2 partial product, accumulated in f32 VMEM scratch.
    acc_ref[...] += jnp.dot(h.astype(matmul_dtype), w2_ref[...],
                            preferred_element_type=jnp.float32)

    @pl.when(h_step == n_h - 1)
    def _finalize():
        out = acc_ref[...] + b2_ref[...]
        if has_dropout:
            out = out * m2_ref[...]
        o_ref[...] = out.astype(o_ref.dtype)


def mlp_pallas(x, w1, b1, w2, b2, *, drop=0.0, training=False, key=None,
               token_tile=256, hidden_tile=1024, matmul_dtype=jnp.bfloat16):
    """Pallas-fused Mlp forward.

    x : (..., D_in)
    w1: (D_in, H),   b1: (H,)      (transpose of PyTorch nn.Linear .weight)
    w2: (H, D_out),  b2: (D_out,)
    Dropout of prob `drop` is applied after the activation and after fc2 only
    when `training and drop > 0` (nn.Dropout semantics); it requires `key`.
    `matmul_dtype` controls the MXU operand dtype (bf16 default; pass
    jnp.float32 for full-precision matmuls).
    """
    D_in = x.shape[-1]
    H = w1.shape[1]
    D_out = w2.shape[1]
    assert w1.shape == (D_in, H) and w2.shape == (H, D_out)
    assert b1.shape == (H,) and b2.shape == (D_out,)

    lead_shape = x.shape[:-1]
    N = int(math.prod(lead_shape)) if lead_shape else 1
    x2 = x.reshape(N, D_in)

    mmdt = jnp.dtype(x.dtype) if matmul_dtype is None else jnp.dtype(matmul_dtype)

    # ---- token tiling: sublane-full (multiple of 8) blocks, 256 rows default.
    tm = int(min(int(token_tile), _round_up(N, 8)))
    tm = _round_up(tm, 8)
    n_pad = _round_up(N, tm)
    if n_pad != N:
        x2 = jnp.pad(x2, ((0, n_pad - N), (0, 0)))

    # ---- lane-dense feature dims: pad H / D_out to multiples of 128.
    d_out_p = _round_up(D_out, 128)
    h_pad = _round_up(H, 128)
    tH = _pick_hidden_tile(h_pad, int(hidden_tile))
    n_h = h_pad // tH
    resident_w = (n_h == 1)   # weights fully VMEM-resident -> single-buffer them

    w1p = w1.astype(mmdt)
    b1p = b1.astype(jnp.float32).reshape(1, H)
    w2p = w2.astype(mmdt)
    b2p = b2.astype(jnp.float32).reshape(1, D_out)
    if h_pad != H:
        w1p = jnp.pad(w1p, ((0, 0), (0, h_pad - H)))
        b1p = jnp.pad(b1p, ((0, 0), (0, h_pad - H)))
        w2p = jnp.pad(w2p, ((0, h_pad - H), (0, 0)))
    if d_out_p != D_out:
        w2p = jnp.pad(w2p, ((0, 0), (0, d_out_p - D_out)))
        b2p = jnp.pad(b2p, ((0, 0), (0, d_out_p - D_out)))

    # ---- dropout masks (pre-scaled: {0, 1/keep_prob}), host-side RNG.
    use_dropout = bool(training) and float(drop) > 0.0
    if use_dropout:
        if key is None:
            raise ValueError("mlp_pallas: dropout in training mode requires an explicit PRNG `key`.")
        keep_prob = 1.0 - float(drop)
        k1, k2 = jax.random.split(key)
        m1 = jax.random.bernoulli(k1, keep_prob, (n_pad, h_pad)).astype(jnp.float32) * (1.0 / keep_prob)
        m2 = jax.random.bernoulli(k2, keep_prob, (n_pad, d_out_p)).astype(jnp.float32) * (1.0 / keep_prob)

    # ---- specs / grid.
    grid = (n_pad // tm, n_h)
    in_specs = [
        _spec((tm, D_in),     lambda i, h: (i, 0)),                              # x token tile
        _spec((D_in, tH),     lambda i, h: (0, h), single_buffer=resident_w),    # W1 slab
        _spec((1, tH),        lambda i, h: (0, h), single_buffer=resident_w),    # b1 slab
        _spec((tH, d_out_p),  lambda i, h: (h, 0), single_buffer=resident_w),    # W2 slab
        _spec((1, d_out_p),   lambda i, h: (0, 0), single_buffer=True),          # b2 (resident)
    ]
    args = [x2, w1p, b1p, w2p, b2p]
    if use_dropout:
        in_specs += [
            _spec((tm, tH),       lambda i, h: (i, h)),                          # post-GELU mask
            _spec((tm, d_out_p),  lambda i, h: (i, 0)),                          # post-fc2 mask
        ]
        args += [m1, m2]
    out_spec = pl.BlockSpec((tm, d_out_p), lambda i, h: (i, 0))

    # ---- explicit scoped-VMEM budget (tiles * buffer counts + headroom).
    isz = lambda dt: jnp.dtype(dt).itemsize
    wbuf = 1 if resident_w else 2
    need = (
        2 * tm * D_in * isz(x2.dtype)            # x tile (double-buffered)
        + wbuf * D_in * tH * isz(mmdt)           # W1 slab
        + wbuf * tH * 4                          # b1 slab (f32)
        + wbuf * tH * d_out_p * isz(mmdt)        # W2 slab
        + d_out_p * 4                            # b2 (f32, single)
        + 2 * tm * d_out_p * isz(x.dtype)        # out tile (double-buffered)
        + tm * d_out_p * 4                       # f32 accumulator scratch
    )
    if use_dropout:
        need += 2 * tm * tH * 4 + 2 * tm * d_out_p * 4
    vmem_limit = int(min(max(2 * need, 32 * 1024 * 1024), 128 * 1024 * 1024))

    kernel = functools.partial(_mlp_kernel, has_dropout=use_dropout, n_h=n_h,
                               matmul_dtype=mmdt)

    out2 = pl.pallas_call(
        kernel,
        out_shape=jax.ShapeDtypeStruct((n_pad, d_out_p), x.dtype),
        grid=grid,
        in_specs=in_specs,
        out_specs=out_spec,
        scratch_shapes=[pltpu.VMEM((tm, d_out_p), jnp.float32)],
        compiler_params=pltpu.CompilerParams(
            dimension_semantics=("parallel", "arbitrary"),
            vmem_limit_bytes=vmem_limit,
        ),
    )(*args)

    out = out2[:N, :D_out]
    return out.reshape(*lead_shape, D_out)


def _mlp_ref(x, w1, b1, w2, b2):
    """Pure-JAX f32 reference (no dropout), same tanh-GELU formulation."""
    h = jnp.dot(x, w1) + b1
    h = 0.5 * h * (1.0 + jnp.tanh(_SQRT_2_OVER_PI * (h + 0.044715 * h * h * h)))
    return jnp.dot(h, w2) + b2


if __name__ == "__main__":
    key = jax.random.PRNGKey(0)
    kx, k1, k2, k3, k4, kdrop = jax.random.split(key, 6)

    # Small transformer-style shapes: (batch, seq, features)
    B, S, D_in, H, D_out = 2, 8, 32, 64, 32
    x = jax.random.normal(kx, (B, S, D_in), dtype=jnp.float32)
    w1 = jax.random.normal(k1, (D_in, H), dtype=jnp.float32) * (1.0 / D_in ** 0.5)
    b1 = jax.random.normal(k2, (H,), dtype=jnp.float32) * 0.1
    w2 = jax.random.normal(k3, (H, D_out), dtype=jnp.float32) * (1.0 / H ** 0.5)
    b2 = jax.random.normal(k4, (D_out,), dtype=jnp.float32) * 0.1

    # Eval / drop=0 path (deterministic, default bf16 matmul operands).
    out = jax.block_until_ready(mlp_pallas(x, w1, b1, w2, b2))
    ref = _mlp_ref(x, w1, b1, w2, b2)
    assert out.shape == ref.shape == (B, S, D_out)
    assert jnp.allclose(out, ref, atol=5e-2, rtol=5e-2), "mismatch vs reference"

    # Training path with dropout: shapes, finiteness, and that post-fc2 dropout
    # zeroes roughly `drop` of the outputs.
    out_d = jax.block_until_ready(
        mlp_pallas(x, w1, b1, w2, b2, drop=0.5, training=True, key=kdrop))
    assert out_d.shape == (B, S, D_out)
    assert bool(jnp.all(jnp.isfinite(out_d)))
    zero_frac = float(jnp.mean((out_d == 0.0).astype(jnp.float32)))
    assert 0.2 < zero_frac < 0.8, f"unexpected dropout zero fraction {zero_frac}"

    print("KERNEL_OK")
</pallas_src>

<mosaic_0001>
module attributes {stable_mosaic.version = 11 : i64} {
  func.func @_mlp_kernel(%arg0: i32, %arg1: i32, %arg2: memref<16x32xf32, #tpu.memory_space<vmem>>, %arg3: memref<32x128xbf16, #tpu.memory_space<vmem>>, %arg4: memref<1x128xf32, #tpu.memory_space<vmem>>, %arg5: memref<128x128xbf16, #tpu.memory_space<vmem>>, %arg6: memref<1x128xf32, #tpu.memory_space<vmem>>, %arg7: memref<16x128xf32, #tpu.memory_space<vmem>>, %arg8: memref<16x128xf32, #tpu.memory_space<vmem>>) attributes {dimension_semantics = [#tpu.dimension_semantics<parallel>, #tpu.dimension_semantics<arbitrary>], iteration_bounds = array<i64: 1, 1>, scalar_prefetch = 0 : i64, scratch_operands = 1 : i64, tpu.core_type = #tpu.core_type<tc>, window_params = [{transform_indices = @transform_0, window_bounds = array<i64: 16, 32>}, {pipeline_mode = #tpu.pipeline_mode<synchronous>, transform_indices = @transform_1, window_bounds = array<i64: 32, 128>}, {pipeline_mode = #tpu.pipeline_mode<synchronous>, transform_indices = @transform_2, window_bounds = array<i64: 1, 128>}, {pipeline_mode = #tpu.pipeline_mode<synchronous>, transform_indices = @transform_3, window_bounds = array<i64: 128, 128>}, {pipeline_mode = #tpu.pipeline_mode<synchronous>, transform_indices = @transform_4, window_bounds = array<i64: 1, 128>}, {transform_indices = @transform_5, window_bounds = array<i64: 16, 128>}]} {
    %c0_i32 = arith.constant 0 : i32
    %0 = arith.cmpi eq, %arg1, %c0_i32 : i32
    %1 = arith.extui %0 : i1 to i32
    %c0_i32_0 = arith.constant 0 : i32
    %2 = arith.cmpi ne, %1, %c0_i32_0 : i32
    scf.if %2 {
      %cst_19 = arith.constant 0.000000e+00 : f32
      %32 = vector.broadcast %cst_19 : f32 to vector<16x128xf32>
      %c0_20 = arith.constant 0 : index
      %c0_21 = arith.constant 0 : index
      %33 = vector.load %arg8[%c0_20, %c0_21] : memref<16x128xf32, #tpu.memory_space<vmem>>, vector<16x128xf32>
      tpu.vector_store %arg8[%c0_20, %c0_21], %32 {strides = array<i32>} : memref<16x128xf32, #tpu.memory_space<vmem>>, vector<16x128xf32>,
    } else {
    }
    %c0 = arith.constant 0 : index
    %c0_1 = arith.constant 0 : index
    %3 = vector.load %arg2[%c0, %c0_1] : memref<16x32xf32, #tpu.memory_space<vmem>>, vector<16x32xf32>
    %4 = arith.truncf %3 : vector<16x32xf32> to vector<16x32xbf16>
    %c0_2 = arith.constant 0 : index
    %c0_3 = arith.constant 0 : index
    %5 = vector.load %arg3[%c0_2, %c0_3] : memref<32x128xbf16, #tpu.memory_space<vmem>>, vector<32x128xbf16>
    %cst = arith.constant dense<0.000000e+00> : vector<16x128xf32>
    %6 = tpu.matmul %4, %5, %cst {dimension_numbers = #tpu.dot_dimension_numbers<[1], [0], [0], [1], [0, 0, 1, 1], [], []>} : vector<16x32xbf16>, vector<32x128xbf16>, vector<16x128xf32> -> vector<16x128xf32>
    %c0_4 = arith.constant 0 : index
    %c0_5 = arith.constant 0 : index
    %7 = vector.load %arg4[%c0_4, %c0_5] : memref<1x128xf32, #tpu.memory_space<vmem>>, vector<1x128xf32>
    %8 = vector.broadcast %7 : vector<1x128xf32> to vector<16x128xf32>
    %9 = arith.addf %6, %8 : vector<16x128xf32>
    %cst_6 = arith.constant 5.000000e-01 : f32
    %10 = vector.broadcast %cst_6 : f32 to vector<16x128xf32>
    %11 = arith.mulf %10, %9 : vector<16x128xf32>
    %cst_7 = arith.constant 4.471500e-02 : f32
    %12 = vector.broadcast %cst_7 : f32 to vector<16x128xf32>
    %13 = arith.mulf %12, %9 : vector<16x128xf32>
    %14 = arith.mulf %13, %9 : vector<16x128xf32>
    %15 = arith.mulf %14, %9 : vector<16x128xf32>
    %16 = arith.addf %9, %15 : vector<16x128xf32>
    %cst_8 = arith.constant 0.797884583 : f32
    %17 = vector.broadcast %cst_8 : f32 to vector<16x128xf32>
    %18 = arith.mulf %17, %16 : vector<16x128xf32>
    %19 = math.tanh %18 : vector<16x128xf32>
    %cst_9 = arith.constant 1.000000e+00 : f32
    %20 = vector.broadcast %cst_9 : f32 to vector<16x128xf32>
    %21 = arith.addf %20, %19 : vector<16x128xf32>
    %22 = arith.mulf %11, %21 : vector<16x128xf32>
    %c0_10 = arith.constant 0 : index
    %c0_11 = arith.constant 0 : index
    %23 = vector.load %arg8[%c0_10, %c0_11] : memref<16x128xf32, #tpu.memory_space<vmem>>, vector<16x128xf32>
    %24 = arith.truncf %22 : vector<16x128xf32> to vector<16x128xbf16>
    %c0_12 = arith.constant 0 : index
    %c0_13 = arith.constant 0 : index
    %25 = vector.load %arg5[%c0_12, %c0_13] : memref<128x128xbf16, #tpu.memory_space<vmem>>, vector<128x128xbf16>
    %cst_14 = arith.constant dense<0.000000e+00> : vector<16x128xf32>
    %26 = tpu.matmul %24, %25, %cst_14 {dimension_numbers = #tpu.dot_dimension_numbers<[1], [0], [0], [1], [0, 0, 1, 1], [], []>} : vector<16x128xbf16>, vector<128x128xbf16>, vector<16x128xf32> -> vector<16x128xf32>
    %27 = arith.addf %23, %26 : vector<16x128xf32>
    %c0_15 = arith.constant 0 : index
    %c0_16 = arith.constant 0 : index
    %28 = vector.load %arg8[%c0_15, %c0_16] : memref<16x128xf32, #tpu.memory_space<vmem>>, vector<16x128xf32>
    tpu.vector_store %arg8[%c0_15, %c0_16], %27 {strides = array<i32>} : memref<16x128xf32, #tpu.memory_space<vmem>>, vector<16x128xf32>,
    %c0_i32_17 = arith.constant 0 : i32
    %29 = arith.cmpi eq, %arg1, %c0_i32_17 : i32
    %30 = arith.extui %29 : i1 to i32
    %c0_i32_18 = arith.constant 0 : i32
    %31 = arith.cmpi ne, %30, %c0_i32_18 : i32
    scf.if %31 {
      %c0_19 = arith.constant 0 : index
      %c0_20 = arith.constant 0 : index
      %32 = vector.load %arg8[%c0_19, %c0_20] : memref<16x128xf32, #tpu.memory_space<vmem>>, vector<16x128xf32>
      %c0_21 = arith.constant 0 : index
      %c0_22 = arith.constant 0 : index
      %33 = vector.load %arg6[%c0_21, %c0_22] : memref<1x128xf32, #tpu.memory_space<vmem>>, vector<1x128xf32>
      %34 = vector.broadcast %33 : vector<1x128xf32> to vector<16x128xf32>
      %35 = arith.addf %32, %34 : vector<16x128xf32>
      %c0_23 = arith.constant 0 : index
      %c0_24 = arith.constant 0 : index
      %36 = vector.load %arg7[%c0_23, %c0_24] : memref<16x128xf32, #tpu.memory_space<vmem>>, vector<16x128xf32>
      tpu.vector_store %arg7[%c0_23, %c0_24], %35 {strides = array<i32>} : memref<16x128xf32, #tpu.memory_space<vmem>>, vector<16x128xf32>,
    } else {
    }
    return
  }
  func.func @transform_0(%arg0: i32, %arg1: i32) -> (i32, i32) {
    %c0_i32 = arith.constant 0 : i32
    %c0_i32_0 = arith.constant 0 : i32
    return %arg0, %c0_i32 : i32, i32
  }
  func.func @transform_1(%arg0: i32, %arg1: i32) -> (i32, i32) {
    %c0_i32 = arith.constant 0 : i32
    %c0_i32_0 = arith.constant 0 : i32
    return %c0_i32, %arg1 : i32, i32
  }
  func.func @transform_2(%arg0: i32, %arg1: i32) -> (i32, i32) {
    %c0_i32 = arith.constant 0 : i32
    %c0_i32_0 = arith.constant 0 : i32
    return %c0_i32, %arg1 : i32, i32
  }
  func.func @transform_3(%arg0: i32, %arg1: i32) -> (i32, i32) {
    %c0_i32 = arith.constant 0 : i32
    %c0_i32_0 = arith.constant 0 : i32
    return %arg1, %c0_i32 : i32, i32
  }
  func.func @transform_4(%arg0: i32, %arg1: i32) -> (i32, i32) {
    %c0_i32 = arith.constant 0 : i32
    %c0_i32_0 = arith.constant 0 : i32
    %c0_i32_1 = arith.constant 0 : i32
    return %c0_i32, %c0_i32_0 : i32, i32
  }
  func.func @transform_5(%arg0: i32, %arg1: i32) -> (i32, i32) {
    %c0_i32 = arith.constant 0 : i32
    %c0_i32_0 = arith.constant 0 : i32
    return %arg0, %c0_i32 : i32, i32
  }
}

</mosaic_0001>

<llo_original>
// kernel: tpu_custom_call.1
$region0: #{tpu_custom_call.1}
  #allocation0 [shape = 'u32[]', space=smem, size = 0x4, offset = 0x4, fixed_abs, tag = 'smem constant byte address 0x4 - core index']
  #allocation1 [shape = 'u32[144,128]{1,0:T(1,128)}', space=vmem, size = 0x12000, scoped, tag = 'internal scratch']
  #allocation2 [shape = 'f32[16,128]{1,0:T(8,128)}', space=vmem, size = 0x2000, scoped, tag = 'scratch operand']
  %s0 = inlined_call_operand.hbm [shape: f32[16,32], index: 0, kind: input, shape index: {}]
  %s1 = inlined_call_operand.hbm [shape: bf16[32,128], index: 1, kind: input, shape index: {}]
  %s2 = inlined_call_operand.vmem [shape: f32[1,128], index: 2, kind: input, shape index: {}]
  %s3 = inlined_call_operand.hbm [shape: bf16[128,128], index: 3, kind: input, shape index: {}]
  %s4 = inlined_call_operand.vmem [shape: f32[1,128], index: 4, kind: input, shape index: {}]
  %s5 = inlined_call_operand.hbm [shape: f32[16,128], index: 5, kind: output, shape index: {}]
  %s6 = sld [smem:[#allocation0]]
  $region50: #{tpu_custom_call.1} parent=0
    _
  %s8 = ssub.s32 1, %s6
  %s9 = scalar_select 0, %s8, %s6
  $region1: #{tpu_custom_call.1} parent=0
    #allocation3 [shape = 'u8[8192]{0}', space=vmem, size = 0x2000, scoped, tag = 'input window, operand 0, single buffered']
    #allocation4 [shape = 's32[1]{0}', space=sflag, size = 0x4, scoped, tag = 'scoped memory for tpu_custom_call.1']
    #allocation5 [shape = 's32[1]{0}', space=sflag, size = 0x4, scoped, tag = 'scoped memory for tpu_custom_call.1']
    #allocation6 [shape = 'u8[8192]{0}', space=vmem, size = 0x2000, scoped, tag = 'input window, operand 1, single buffered']
    #allocation7 [shape = 's32[1]{0}', space=sflag, size = 0x4, scoped, tag = 'scoped memory for tpu_custom_call.1']
    #allocation8 [shape = 'u8[32768]{0}', space=vmem, size = 0x8000, scoped, tag = 'input window, operand 3, single buffered']
    #allocation9 [shape = 'u8[8192]{0}', space=vmem, size = 0x2000, scoped, tag = 'output window, operand 0, single buffered']
    %10 = vsyncpa [#allocation4], 0
    %11 = vsyncpa [#allocation7], 0
    %12 = vsyncpa [#allocation5], 0
    // Predicated region
    $region2: #{tpu_custom_call.1} parent=1 // pred_check
      _
    $region3: #{tpu_custom_call.1} parent=1 // pred_check_branch
      %14 = sbr.rel (0) target = $region5
    $region4: #{tpu_custom_call.1} parent=1 // pred_region
      %s16 = ssub.s32 256, 256
      %17 = vsyncadd [#allocation4], %s16
      %s18 = sshll.u32 [#allocation3], 4
      %s19 = int_to_ptr.vmem [resolvable:$true] %s18
      %24 = dma.hbm_to_vmem [thread:$0]  %s0, 256, %s19, [#allocation4], 128, 128, 8
    $region5: #{tpu_custom_call.1} parent=1 // pred_fallthru
      _
    // Predicated region
    $region6: #{tpu_custom_call.1} parent=1 // pred_check
      _
    $region7: #{tpu_custom_call.1} parent=1 // pred_check_branch
      %26 = sbr.rel (0) target = $region9
    $region8: #{tpu_custom_call.1} parent=1 // pred_region
      %s28 = ssub.s32 256, 256
      %29 = vsyncadd [#allocation7], %s28
      %s30 = sshll.u32 [#allocation6], 4
      %s31 = int_to_ptr.vmem [resolvable:$true] %s30
      %36 = dma.hbm_to_vmem [thread:$0]  %s1, 256, %s31, [#allocation7], 64, 64, 4
    $region9: #{tpu_custom_call.1} parent=1 // pred_fallthru
      _
    // Predicated region
    $region10: #{tpu_custom_call.1} parent=1 // pred_check
      _
    $region11: #{tpu_custom_call.1} parent=1 // pred_check_branch
      %38 = sbr.rel (0) target = $region13
    $region12: #{tpu_custom_call.1} parent=1 // pred_region
      _
    $region13: #{tpu_custom_call.1} parent=1 // pred_fallthru
      _
    // Predicated region
    $region14: #{tpu_custom_call.1} parent=1 // pred_check
      _
    $region15: #{tpu_custom_call.1} parent=1 // pred_check_branch
      %40 = sbr.rel (0) target = $region17
    $region16: #{tpu_custom_call.1} parent=1 // pred_region
      %s42 = ssub.s32 1024, 1024
      %43 = vsyncadd [#allocation7], %s42
      %s44 = sshll.u32 [#allocation8], 4
      %s45 = int_to_ptr.vmem [resolvable:$true] %s44
      %50 = dma.hbm_to_vmem [thread:$0]  %s3, 1024, %s45, [#allocation7], 64, 64, 4
    $region17: #{tpu_custom_call.1} parent=1 // pred_fallthru
      _
    // Predicated region
    $region18: #{tpu_custom_call.1} parent=1 // pred_check
      _
    $region19: #{tpu_custom_call.1} parent=1 // pred_check_branch
      %52 = sbr.rel (0) target = $region21
    $region20: #{tpu_custom_call.1} parent=1 // pred_region
      _
    $region21: #{tpu_custom_call.1} parent=1 // pred_fallthru
      _
    // Predicated region
    $region22: #{tpu_custom_call.1} parent=1 // pred_check
      _
    $region23: #{tpu_custom_call.1} parent=1 // pred_check_branch
      %54 = sbr.rel (0) target = $region25
    $region24: #{tpu_custom_call.1} parent=1 // pred_region
      %55 = dma.done [#allocation4], 256
    $region25: #{tpu_custom_call.1} parent=1 // pred_fallthru
      _
    // Predicated region
    $region26: #{tpu_custom_call.1} parent=1 // pred_check
      _
    $region27: #{tpu_custom_call.1} parent=1 // pred_check_branch
      %57 = sbr.rel (0) target = $region29
    $region28: #{tpu_custom_call.1} parent=1 // pred_region
      %58 = dma.done [#allocation7], 256
    $region29: #{tpu_custom_call.1} parent=1 // pred_fallthru
      _
    // Predicated region
    $region30: #{tpu_custom_call.1} parent=1 // pred_check
      _
    $region31: #{tpu_custom_call.1} parent=1 // pred_check_branch
      %60 = sbr.rel (0) target = $region33
    $region32: #{tpu_custom_call.1} parent=1 // pred_region
      %61 = dma.done [#allocation7], 1024
    $region33: #{tpu_custom_call.1} parent=1 // pred_fallthru
      _
    %p63 = scmp.eq.s32.totalorder 0, 0
    // Predicated region
    $region34: #{tpu_custom_call.1} parent=1 // pred_check
      %p64 = pneg %p63
    $region35: #{tpu_custom_call.1} parent=1 // pred_check_branch
      %66 = sbr.rel (%p64) target = $region37
    $region36: #{tpu_custom_call.1} parent=1 // pred_region
      %67 = vst [vmem:[#allocation2] sm:$0xff] 0.0
      %68 = vst [vmem:[#allocation2 + $0x8] sm:$0xff] 0.0
    $region37: #{tpu_custom_call.1} parent=1 // pred_fallthru
      _
    %v69 = vld [vmem:[#allocation3] sm:$0xff]
    %v70 = vld [vmem:[#allocation3 + $0x8] sm:$0xff]
    %v71 = vpack.c.bf16 %v70, %v69
    %v72 = vld [vmem:[#allocation6] sm:$0xf]
    %v73 = vld [vmem:[#allocation6 + $0x4] sm:$0xf]
    %v74 = vld [vmem:[#allocation6 + $0x8] sm:$0xf]
    %v75 = vld [vmem:[#allocation6 + $0xc] sm:$0xf]
    %v76 = vld [vmem:[%s2] sm:$0x1]
    %v78 = vlaneseq
    %v79 = vshrl.u32 %v78, 7
    %v80 = vsub.s32 0, %v79
    %v81 = vrot.slane %v76, %v80
    %v87 = vunpack.c.l.b16 %v72
    %v88 = vunpack.c.l.b16 %v73
    %v89 = vunpack.c.l.b16 %v74
    %v90 = vunpack.c.l.b16 %v75
    %v91 = vpack.c.b16 %v88, %v87
    %v92 = vpack.c.b16 %v90, %v89
    %vm95 = vcmask 261120
    %v97 = vsel %vm95, %v71, 0
    %99 = vmatprep.subr.bf16.mxu0 0
    %100 = vmatpush1.bf16.msra.mxu0 %v91
    %101 = vmatprep.subr.bf16.mxu0 0
    %102 = vmatpush1.bf16.msra.mxu0 %v92
    %103 = vmatprep.subr.bf16.mxu0 0
    %104 = vmatpush1.bf16.msra.mxu0 0
    %105 = vmatprep.subr.bf16.mxu0 0
    %106 = vmatpush1.bf16.msra.mxu0 0
    %107 = vmatprep.subr.bf16.mxu0 0
    %108 = vmatpush1.bf16.msra.mxu0 0
    %109 = vmatprep.subr.bf16.mxu0 0
    %110 = vmatpush1.bf16.msra.mxu0 0
    %111 = vmatprep.subr.bf16.mxu0 0
    %112 = vmatpush1.bf16.msra.mxu0 0
    %113 = vmatprep.subr.bf16.mxu0 0
    %114 = vmatpush1.bf16.msra.mxu0 0
    %115 = vmatprep.subr.bf16.mxu0 0
    %116 = vmatpush1.bf16.msra.mxu0 0
    %117 = vmatprep.subr.bf16.mxu0 0
    %118 = vmatpush1.bf16.msra.mxu0 0
    %119 = vmatprep.subr.bf16.mxu0 0
    %120 = vmatpush1.bf16.msra.mxu0 0
    %121 = vmatprep.subr.bf16.mxu0 0
    %122 = vmatpush1.bf16.msra.mxu0 0
    %123 = vmatprep.subr.bf16.mxu0 0
    %124 = vmatpush1.bf16.msra.mxu0 0
    %125 = vmatprep.subr.bf16.mxu0 0
    %126 = vmatpush1.bf16.msra.mxu0 0
    %127 = vmatprep.subr.bf16.mxu0 0
    %128 = vmatpush1.bf16.msra.mxu0 0
    %129 = vmatprep.subr.bf16.mxu0 0
    %130 = vmatpush1.bf16.msra.mxu0 0
    %131 = vmatprep.mubr.bf16.mxu0 0
    %132 = vmatmul.mubr.bf16.gmra.mrb[0].mxu0 %v97
    %v133 = vpop.f32.mrb[0].mxu0
    %v134 = vadd.f32 %v81, %v133
    %v135 = vpop.f32.mrb[0].mxu0
    %v136 = vpop.f32.mrb[0].mxu0
    %v137 = vadd.f32 %v81, %v136
    %v138 = vpop.f32.mrb[0].mxu0
    %139 = vdwg.mxu0
    %v140 = vmul.f32 %v134, 0.5
    %v141 = vmul.f32 %v137, 0.5
    %v142 = vmul.f32 %v134, 0.044715
    %v143 = vmul.f32 %v137, 0.044715
    %v144 = vmul.f32 %v142, %v134
    %v145 = vmul.f32 %v143, %v137
    %v146 = vmul.f32 %v144, %v134
    %v147 = vmul.f32 %v145, %v137
    %v148 = vadd.f32 %v134, %v146
    %v149 = vadd.f32 %v137, %v147
    %v150 = vmul.f32 %v148, 0.7978846
    %v151 = vmul.f32 %v149, 0.7978846
    %v152 = vtanh.pop %v150
    %v153 = vtanh.pop %v151
    %v154 = vadd.f32 %v152, 1.0
    %v155 = vadd.f32 %v153, 1.0
    %v156 = vmul.f32 %v140, %v154
    %v157 = vmul.f32 %v141, %v155
    %v158 = vld [vmem:[#allocation2] sm:$0xff]
    %v159 = vld [vmem:[#allocation2 + $0x8] sm:$0xff]
    %v160 = vpack.c.bf16 %v157, %v156
    %v161 = vld [vmem:[#allocation8] sm:$0xf]
    %v162 = vld [vmem:[#allocation8 + $0x4] sm:$0xf]
    %v163 = vld [vmem:[#allocation8 + $0x8] sm:$0xf]
    %v164 = vld [vmem:[#allocation8 + $0xc] sm:$0xf]
    %v165 = vld [vmem:[#allocation8 + $0x10] sm:$0xf]
    %v166 = vld [vmem:[#allocation8 + $0x14] sm:$0xf]
    %v167 = vld [vmem:[#allocation8 + $0x18] sm:$0xf]
    %v168 = vld [vmem:[#allocation8 + $0x1c] sm:$0xf]
    %v169 = vld [vmem:[#allocation8 + $0x20] sm:$0xf]
    %v170 = vld [vmem:[#allocation8 + $0x24] sm:$0xf]
    %v171 = vld [vmem:[#allocation8 + $0x28] sm:$0xf]
    %v172 = vld [vmem:[#allocation8 + $0x2c] sm:$0xf]
    %v173 = vld [vmem:[#allocation8 + $0x30] sm:$0xf]
    %v174 = vld [vmem:[#allocation8 + $0x34] sm:$0xf]
    %v175 = vld [vmem:[#allocation8 + $0x38] sm:$0xf]
    %v176 = vld [vmem:[#allocation8 + $0x3c] sm:$0xf]
    %v193 = vunpack.c.l.b16 %v161
    %v194 = vunpack.c.l.b16 %v162
    %v195 = vunpack.c.l.b16 %v163
    %v196 = vunpack.c.l.b16 %v164
    %v197 = vunpack.c.l.b16 %v165
    %v198 = vunpack.c.l.b16 %v166
    %v199 = vunpack.c.l.b16 %v167
    %v200 = vunpack.c.l.b16 %v168
    %v201 = vunpack.c.l.b16 %v169
    %v202 = vunpack.c.l.b16 %v170
    %v203 = vunpack.c.l.b16 %v171
    %v204 = vunpack.c.l.b16 %v172
    %v205 = vunpack.c.l.b16 %v173
    %v206 = vunpack.c.l.b16 %v174
    %v207 = vunpack.c.l.b16 %v175
    %v208 = vunpack.c.l.b16 %v176
    %v209 = vpack.c.b16 %v194, %v193
    %v210 = vpack.c.b16 %v196, %v195
    %v211 = vpack.c.b16 %v198, %v197
    %v212 = vpack.c.b16 %v200, %v199
    %v213 = vpack.c.b16 %v202, %v201
    %v214 = vpack.c.b16 %v204, %v203
    %v215 = vpack.c.b16 %v206, %v205
    %v216 = vpack.c.b16 %v208, %v207
    %225 = vmatprep.subr.bf16.mxu0 0
    %226 = vmatpush1.bf16.msra.mxu0 %v209
    %227 = vmatprep.subr.bf16.mxu0 0
    %228 = vmatpush1.bf16.msra.mxu0 %v210
    %229 = vmatprep.subr.bf16.mxu0 0
    %230 = vmatpush1.bf16.msra.mxu0 %v211
    %231 = vmatprep.subr.bf16.mxu0 0
    %232 = vmatpush1.bf16.msra.mxu0 %v212
    %233 = vmatprep.subr.bf16.mxu0 0
    %234 = vmatpush1.bf16.msra.mxu0 %v213
    %235 = vmatprep.subr.bf16.mxu0 0
    %236 = vmatpush1.bf16.msra.mxu0 %v214
    %237 = vmatprep.subr.bf16.mxu0 0
    %238 = vmatpush1.bf16.msra.mxu0 %v215
    %239 = vmatprep.subr.bf16.mxu0 0
    %240 = vmatpush1.bf16.msra.mxu0 %v216
    %241 = vmatprep.subr.bf16.mxu0 0
    %242 = vmatpush1.bf16.msra.mxu0 0
    %243 = vmatprep.subr.bf16.mxu0 0
    %244 = vmatpush1.bf16.msra.mxu0 0
    %245 = vmatprep.subr.bf16.mxu0 0
    %246 = vmatpush1.bf16.msra.mxu0 0
    %247 = vmatprep.subr.bf16.mxu0 0
    %248 = vmatpush1.bf16.msra.mxu0 0
    %249 = vmatprep.subr.bf16.mxu0 0
    %250 = vmatpush1.bf16.msra.mxu0 0
    %251 = vmatprep.subr.bf16.mxu0 0
    %252 = vmatpush1.bf16.msra.mxu0 0
    %253 = vmatprep.subr.bf16.mxu0 0
    %254 = vmatpush1.bf16.msra.mxu0 0
    %255 = vmatprep.subr.bf16.mxu0 0
    %256 = vmatpush1.bf16.msra.mxu0 0
    %257 = vmatprep.mubr.bf16.mxu0 0
    %258 = vmatmul.mubr.bf16.gmra.mrb[0].mxu0 %v160
    %v259 = vpop.f32.mrb[0].mxu0
    %v260 = vadd.f32 0.0, %v259
    %v261 = vpop.f32.mrb[0].mxu0
    %v262 = vpop.f32.mrb[0].mxu0
    %v263 = vadd.f32 0.0, %v262
    %v264 = vpop.f32.mrb[0].mxu0
    %265 = vdwg.mxu0
    %v266 = vadd.f32 %v158, %v260
    %v267 = vadd.f32 %v159, %v263
    %268 = vst [vmem:[#allocation2] sm:$0xff] %v266
    %269 = vst [vmem:[#allocation2 + $0x8] sm:$0xff] %v267
    // Predicated region
    $region38: #{tpu_custom_call.1} parent=1 // pred_check
      %p270 = pneg %p63
    $region39: #{tpu_custom_call.1} parent=1 // pred_check_branch
      %272 = sbr.rel (%p270) target = $region41
    $region40: #{tpu_custom_call.1} parent=1 // pred_region
      %v273 = vld [vmem:[#allocation2] sm:$0xff]
      %v274 = vld [vmem:[#allocation2 + $0x8] sm:$0xff]
      %v275 = vld [vmem:[%s4] sm:$0x1]
      %v277 = vlaneseq
      %v278 = vshrl.u32 %v277, 7
      %v279 = vsub.s32 0, %v278
      %v280 = vrot.slane %v275, %v279
      %v282 = vadd.f32 %v273, %v280
      %v283 = vadd.f32 %v274, %v280
      %284 = vst [vmem:[#allocation9] sm:$0xff] %v282
      %285 = vst [vmem:[#allocation9 + $0x8] sm:$0xff] %v283
    $region41: #{tpu_custom_call.1} parent=1 // pred_fallthru
      _
    // Predicated region
    $region42: #{tpu_custom_call.1} parent=1 // pred_check
      _
    $region43: #{tpu_custom_call.1} parent=1 // pred_check_branch
      %287 = sbr.rel (0) target = $region45
    $region44: #{tpu_custom_call.1} parent=1 // pred_region
      %s289 = ssub.s32 256, 256
      %290 = vsyncadd [#allocation5], %s289
      %s291 = sshll.u32 [#allocation9], 4
      %s292 = int_to_ptr.vmem [resolvable:$true] %s291
      %297 = dma.vmem_to_hbm [thread:$0]  %s292, 256, %s5, [#allocation5], 128, 128, 8
    $region45: #{tpu_custom_call.1} parent=1 // pred_fallthru
      _
    // Predicated region
    $region46: #{tpu_custom_call.1} parent=1 // pred_check
      _
    $region47: #{tpu_custom_call.1} parent=1 // pred_check_branch
      %299 = sbr.rel (0) target = $region49
    $region48: #{tpu_custom_call.1} parent=1 // pred_region
      %300 = dma.done [#allocation5], 256
    $region49: #{tpu_custom_call.1} parent=1 // pred_fallthru
      _
    %301 = vsyncpa [#allocation4], 1
    %302 = vsyncpa [#allocation7], 1
    %303 = vsyncpa [#allocation5], 1

</llo_original>
